<compile_context>
chip_gen: v7x
topology: tpu7x:2x2x1
jax: 0.10.0
libtpu: 0.0.40
codegen_flags: <defaults>
</compile_context>

<pallas_src>
import numpy as np
import jax
import jax.numpy as jnp
from jax import lax
from jax.experimental import pallas as pl
from jax.experimental.pallas import tpu as pltpu


def _tap_masks(H, W):
    """0/1 float masks (9, H*W): mask[k, h*W + w] == 1 iff tap k = dy*3 + dx
    reads an in-bounds input pixel at output position (h, w) for padding=1."""
    row = np.arange(H)[:, None]
    col = np.arange(W)[None, :]
    masks = []
    for dy in range(3):
        for dx in range(3):
            m = ((row + dy - 1 >= 0) & (row + dy - 1 < H) &
                 (col + dx - 1 >= 0) & (col + dx - 1 < W))
            masks.append(m.astype(np.float32).reshape(-1))
    return jnp.asarray(np.stack(masks, axis=0))          # (9, H*W)


def _make_conv_kernel(W):
    """3x3 / stride-1 / pad-1 / bias-free conv for one batch element as a
    single im2col matmul on the MXU.

    x_ref: (1, Cin, H*W)   flattened activation (lane dim = H*W)
    w_ref: (Cout, 9*Cin)   weights, rows ordered (dy, dx)-major then channel
    m_ref: (9, H*W)        0/1 edge masks per tap
    o_ref: (1, Cout, H*W)  conv output, lane-dense
    """

    def kernel(x_ref, w_ref, m_ref, o_ref):
        x = x_ref[0]                      # (Cin, H*W)  f32
        masks = m_ref[...]                # (9, H*W)    f32

        taps = []
        for dy in range(3):
            for dx in range(3):
                off = (dy - 1) * W + (dx - 1)
                if off == 0:
                    shifted = x
                else:
                    # shifted[:, p] == x[:, (p + off) mod H*W]; any values that
                    # wrapped across the image edge are zeroed by the tap mask.
                    shifted = jnp.concatenate([x[:, off:], x[:, :off]], axis=1)
                k = dy * 3 + dx
                taps.append(shifted * masks[k:k + 1])
        im2col = jnp.concatenate(taps, axis=0)            # (9*Cin, H*W)

        out = jnp.dot(w_ref[...], im2col,
                      preferred_element_type=jnp.float32)  # (Cout, H*W)
        o_ref[0] = out.astype(o_ref.dtype)

    return kernel


@jax.jit
def upsample_forward(x_nchw, w_oihw):
    """Equivalent of Upsample.forward: conv3x3(no bias) -> PixelShuffle(2).

    x_nchw: (N, n_feat, H, W)
    w_oihw: (2*n_feat, n_feat, 3, 3)   (PyTorch Conv2d weight layout)
    returns: (N, n_feat // 2, 2*H, 2*W) in NCHW, matching PyTorch.
    """
    N, Cin, H, W = x_nchw.shape
    Cout = w_oihw.shape[0]
    HW = H * W

    # Free layout glue: NCHW -> (N, Cin, H*W) merges the trailing dims.
    x_flat = x_nchw.reshape(N, Cin, HW)
    # OIHW -> (Cout, 9*Cin) with columns ordered (dy*3 + dx)*Cin + c.
    w_mat = jnp.transpose(w_oihw, (0, 2, 3, 1)).reshape(Cout, 9 * Cin)
    masks = _tap_masks(H, W)

    conv_flat = pl.pallas_call(
        _make_conv_kernel(W),
        out_shape=jax.ShapeDtypeStruct((N, Cout, HW), x_nchw.dtype),
        grid=(N,),
        in_specs=[
            pl.BlockSpec((1, Cin, HW), lambda n: (n, 0, 0)),
            pl.BlockSpec((Cout, 9 * Cin), lambda n: (0, 0)),
            pl.BlockSpec((9, HW), lambda n: (0, 0)),
        ],
        out_specs=pl.BlockSpec((1, Cout, HW), lambda n: (n, 0, 0)),
        compiler_params=pltpu.CompilerParams(
            dimension_semantics=("parallel",),
            vmem_limit_bytes=48 * 1024 * 1024),
    )(x_flat, w_mat, masks)

    # PixelShuffle(2): exactly one transpose pass; the reshapes around it are
    # trailing-dim splits/merges (free).
    r = 2
    c_out = Cout // (r * r)
    y = conv_flat.reshape(N, c_out, r, r, H, W)
    y = jnp.transpose(y, (0, 1, 4, 2, 5, 3))              # (N, c, H, r, W, r)
    return y.reshape(N, c_out, H * r, W * r)


def _reference(x_nchw, w_oihw):
    """Pure-JAX reference: lax conv + pixel shuffle, for correctness check."""
    conv = lax.conv_general_dilated(
        x_nchw, w_oihw, window_strides=(1, 1), padding=((1, 1), (1, 1)),
        dimension_numbers=("NCHW", "OIHW", "NCHW"))
    N, Cout, H, W = conv.shape
    r = 2
    c_out = Cout // (r * r)
    y = conv.reshape(N, c_out, r, r, H, W)
    y = jnp.transpose(y, (0, 1, 4, 2, 5, 3))
    return y.reshape(N, c_out, H * r, W * r)


if __name__ == "__main__":
    n_feat = 4
    N, H, W = 2, 16, 16

    key = jax.random.PRNGKey(0)
    kx, kw = jax.random.split(key)
    x = jax.random.normal(kx, (N, n_feat, H, W), dtype=jnp.float32)
    # Conv2d(n_feat, 2*n_feat, 3, bias=False) weight, deterministic init.
    w = jax.random.normal(kw, (2 * n_feat, n_feat, 3, 3), dtype=jnp.float32) * 0.1

    out = jax.block_until_ready(upsample_forward(x, w))
    ref = jax.block_until_ready(_reference(x, w))

    assert out.shape == (N, n_feat // 2, 2 * H, 2 * W), out.shape
    assert jnp.allclose(out, ref, atol=1e-4, rtol=1e-4), "mismatch vs reference"
    print("KERNEL_OK")
</pallas_src>

<mosaic_0001>
module attributes {stable_mosaic.version = 11 : i64} {
  func.func @kernel(%arg0: i32, %arg1: memref<1x4x256xf32, #tpu.memory_space<vmem>>, %arg2: memref<8x36xf32, #tpu.memory_space<vmem>>, %arg3: memref<9x256xf32, #tpu.memory_space<vmem>>, %arg4: memref<1x8x256xf32, #tpu.memory_space<vmem>>) attributes {dimension_semantics = [#tpu.dimension_semantics<parallel>], iteration_bounds = array<i64: 2>, scalar_prefetch = 0 : i64, scratch_operands = 0 : i64, tpu.core_type = #tpu.core_type<tc>, window_params = [{transform_indices = @transform_0, window_bounds = array<i64: 1, 4, 256>}, {pipeline_mode = #tpu.pipeline_mode<synchronous>, transform_indices = @transform_1, window_bounds = array<i64: 8, 36>}, {pipeline_mode = #tpu.pipeline_mode<synchronous>, transform_indices = @transform_2, window_bounds = array<i64: 9, 256>}, {transform_indices = @transform_3, window_bounds = array<i64: 1, 8, 256>}]} {
    %c0 = arith.constant 0 : index
    %c0_0 = arith.constant 0 : index
    %c0_1 = arith.constant 0 : index
    %0 = vector.load %arg1[%c0, %c0_0, %c0_1] : memref<1x4x256xf32, #tpu.memory_space<vmem>>, vector<1x4x256xf32>
    %1 = vector.shape_cast %0 : vector<1x4x256xf32> to vector<4x256xf32>
    %c0_2 = arith.constant 0 : index
    %c0_3 = arith.constant 0 : index
    %2 = vector.load %arg3[%c0_2, %c0_3] : memref<9x256xf32, #tpu.memory_space<vmem>>, vector<9x256xf32>
    %3 = vector.extract_strided_slice %1 {offsets = [0, 239], sizes = [4, 17], strides = [1, 1]} : vector<4x256xf32> to vector<4x17xf32>
    %4 = vector.extract_strided_slice %1 {offsets = [0, 0], sizes = [4, 239], strides = [1, 1]} : vector<4x256xf32> to vector<4x239xf32>
    %5 = tpu.concatenate %3, %4 in 1 : vector<4x17xf32>, vector<4x239xf32> -> vector<4x256xf32>
    %6 = vector.extract_strided_slice %2 {offsets = [0, 0], sizes = [1, 256], strides = [1, 1]} : vector<9x256xf32> to vector<1x256xf32>
    %7 = vector.broadcast %6 : vector<1x256xf32> to vector<4x256xf32>
    %8 = arith.mulf %5, %7 : vector<4x256xf32>
    %9 = vector.extract_strided_slice %1 {offsets = [0, 240], sizes = [4, 16], strides = [1, 1]} : vector<4x256xf32> to vector<4x16xf32>
    %10 = vector.extract_strided_slice %1 {offsets = [0, 0], sizes = [4, 240], strides = [1, 1]} : vector<4x256xf32> to vector<4x240xf32>
    %11 = tpu.concatenate %9, %10 in 1 : vector<4x16xf32>, vector<4x240xf32> -> vector<4x256xf32>
    %12 = vector.extract_strided_slice %2 {offsets = [1, 0], sizes = [1, 256], strides = [1, 1]} : vector<9x256xf32> to vector<1x256xf32>
    %13 = vector.broadcast %12 : vector<1x256xf32> to vector<4x256xf32>
    %14 = arith.mulf %11, %13 : vector<4x256xf32>
    %15 = vector.extract_strided_slice %1 {offsets = [0, 241], sizes = [4, 15], strides = [1, 1]} : vector<4x256xf32> to vector<4x15xf32>
    %16 = vector.extract_strided_slice %1 {offsets = [0, 0], sizes = [4, 241], strides = [1, 1]} : vector<4x256xf32> to vector<4x241xf32>
    %17 = tpu.concatenate %15, %16 in 1 : vector<4x15xf32>, vector<4x241xf32> -> vector<4x256xf32>
    %18 = vector.extract_strided_slice %2 {offsets = [2, 0], sizes = [1, 256], strides = [1, 1]} : vector<9x256xf32> to vector<1x256xf32>
    %19 = vector.broadcast %18 : vector<1x256xf32> to vector<4x256xf32>
    %20 = arith.mulf %17, %19 : vector<4x256xf32>
    %21 = vector.extract_strided_slice %1 {offsets = [0, 255], sizes = [4, 1], strides = [1, 1]} : vector<4x256xf32> to vector<4x1xf32>
    %22 = vector.extract_strided_slice %1 {offsets = [0, 0], sizes = [4, 255], strides = [1, 1]} : vector<4x256xf32> to vector<4x255xf32>
    %23 = tpu.concatenate %21, %22 in 1 : vector<4x1xf32>, vector<4x255xf32> -> vector<4x256xf32>
    %24 = vector.extract_strided_slice %2 {offsets = [3, 0], sizes = [1, 256], strides = [1, 1]} : vector<9x256xf32> to vector<1x256xf32>
    %25 = vector.broadcast %24 : vector<1x256xf32> to vector<4x256xf32>
    %26 = arith.mulf %23, %25 : vector<4x256xf32>
    %27 = vector.extract_strided_slice %2 {offsets = [4, 0], sizes = [1, 256], strides = [1, 1]} : vector<9x256xf32> to vector<1x256xf32>
    %28 = vector.broadcast %27 : vector<1x256xf32> to vector<4x256xf32>
    %29 = arith.mulf %1, %28 : vector<4x256xf32>
    %30 = vector.extract_strided_slice %1 {offsets = [0, 1], sizes = [4, 255], strides = [1, 1]} : vector<4x256xf32> to vector<4x255xf32>
    %31 = vector.extract_strided_slice %1 {offsets = [0, 0], sizes = [4, 1], strides = [1, 1]} : vector<4x256xf32> to vector<4x1xf32>
    %32 = tpu.concatenate %30, %31 in 1 : vector<4x255xf32>, vector<4x1xf32> -> vector<4x256xf32>
    %33 = vector.extract_strided_slice %2 {offsets = [5, 0], sizes = [1, 256], strides = [1, 1]} : vector<9x256xf32> to vector<1x256xf32>
    %34 = vector.broadcast %33 : vector<1x256xf32> to vector<4x256xf32>
    %35 = arith.mulf %32, %34 : vector<4x256xf32>
    %36 = vector.extract_strided_slice %1 {offsets = [0, 15], sizes = [4, 241], strides = [1, 1]} : vector<4x256xf32> to vector<4x241xf32>
    %37 = vector.extract_strided_slice %1 {offsets = [0, 0], sizes = [4, 15], strides = [1, 1]} : vector<4x256xf32> to vector<4x15xf32>
    %38 = tpu.concatenate %36, %37 in 1 : vector<4x241xf32>, vector<4x15xf32> -> vector<4x256xf32>
    %39 = vector.extract_strided_slice %2 {offsets = [6, 0], sizes = [1, 256], strides = [1, 1]} : vector<9x256xf32> to vector<1x256xf32>
    %40 = vector.broadcast %39 : vector<1x256xf32> to vector<4x256xf32>
    %41 = arith.mulf %38, %40 : vector<4x256xf32>
    %42 = vector.extract_strided_slice %1 {offsets = [0, 16], sizes = [4, 240], strides = [1, 1]} : vector<4x256xf32> to vector<4x240xf32>
    %43 = vector.extract_strided_slice %1 {offsets = [0, 0], sizes = [4, 16], strides = [1, 1]} : vector<4x256xf32> to vector<4x16xf32>
    %44 = tpu.concatenate %42, %43 in 1 : vector<4x240xf32>, vector<4x16xf32> -> vector<4x256xf32>
    %45 = vector.extract_strided_slice %2 {offsets = [7, 0], sizes = [1, 256], strides = [1, 1]} : vector<9x256xf32> to vector<1x256xf32>
    %46 = vector.broadcast %45 : vector<1x256xf32> to vector<4x256xf32>
    %47 = arith.mulf %44, %46 : vector<4x256xf32>
    %48 = vector.extract_strided_slice %1 {offsets = [0, 17], sizes = [4, 239], strides = [1, 1]} : vector<4x256xf32> to vector<4x239xf32>
    %49 = vector.extract_strided_slice %1 {offsets = [0, 0], sizes = [4, 17], strides = [1, 1]} : vector<4x256xf32> to vector<4x17xf32>
    %50 = tpu.concatenate %48, %49 in 1 : vector<4x239xf32>, vector<4x17xf32> -> vector<4x256xf32>
    %51 = vector.extract_strided_slice %2 {offsets = [8, 0], sizes = [1, 256], strides = [1, 1]} : vector<9x256xf32> to vector<1x256xf32>
    %52 = vector.broadcast %51 : vector<1x256xf32> to vector<4x256xf32>
    %53 = arith.mulf %50, %52 : vector<4x256xf32>
    %54 = tpu.concatenate %8, %14, %20, %26, %29, %35, %41, %47, %53 in 0 : vector<4x256xf32>, vector<4x256xf32>, vector<4x256xf32>, vector<4x256xf32>, vector<4x256xf32>, vector<4x256xf32>, vector<4x256xf32>, vector<4x256xf32>, vector<4x256xf32> -> vector<36x256xf32>
    %c0_4 = arith.constant 0 : index
    %c0_5 = arith.constant 0 : index
    %55 = vector.load %arg2[%c0_4, %c0_5] : memref<8x36xf32, #tpu.memory_space<vmem>>, vector<8x36xf32>
    %cst = arith.constant dense<0.000000e+00> : vector<8x256xf32>
    %56 = tpu.matmul %55, %54, %cst {dimension_numbers = #tpu.dot_dimension_numbers<[1], [0], [0], [1], [0, 0, 1, 1], [], []>} : vector<8x36xf32>, vector<36x256xf32>, vector<8x256xf32> -> vector<8x256xf32>
    %c0_6 = arith.constant 0 : index
    %c0_7 = arith.constant 0 : index
    %c0_8 = arith.constant 0 : index
    %57 = vector.load %arg4[%c0_6, %c0_7, %c0_8] : memref<1x8x256xf32, #tpu.memory_space<vmem>>, vector<1x8x256xf32>
    %58 = vector.shape_cast %57 : vector<1x8x256xf32> to vector<8x256xf32>
    %59 = vector.shape_cast %56 : vector<8x256xf32> to vector<1x8x256xf32>
    tpu.vector_store %arg4[%c0_6, %c0_7, %c0_8], %59 {strides = array<i32>} : memref<1x8x256xf32, #tpu.memory_space<vmem>>, vector<1x8x256xf32>,
    return
  }
  func.func @transform_0(%arg0: i32) -> (i32, i32, i32) {
    %c0_i32 = arith.constant 0 : i32
    %c0_i32_0 = arith.constant 0 : i32
    %c0_i32_1 = arith.constant 0 : i32
    return %arg0, %c0_i32, %c0_i32_0 : i32, i32, i32
  }
  func.func @transform_1(%arg0: i32) -> (i32, i32) {
    %c0_i32 = arith.constant 0 : i32
    %c0_i32_0 = arith.constant 0 : i32
    %c0_i32_1 = arith.constant 0 : i32
    return %c0_i32, %c0_i32_0 : i32, i32
  }
  func.func @transform_2(%arg0: i32) -> (i32, i32) {
    %c0_i32 = arith.constant 0 : i32
    %c0_i32_0 = arith.constant 0 : i32
    %c0_i32_1 = arith.constant 0 : i32
    return %c0_i32, %c0_i32_0 : i32, i32
  }
  func.func @transform_3(%arg0: i32) -> (i32, i32, i32) {
    %c0_i32 = arith.constant 0 : i32
    %c0_i32_0 = arith.constant 0 : i32
    %c0_i32_1 = arith.constant 0 : i32
    return %arg0, %c0_i32, %c0_i32_0 : i32, i32, i32
  }
}

</mosaic_0001>

<llo_original>
// kernel: upsample_forward.1
$region0: #{upsample_forward.1}
  #allocation0 [shape = 'u32[]', space=smem, size = 0x4, offset = 0x4, fixed_abs, tag = 'smem constant byte address 0x4 - core index']
  #allocation1 [shape = 'u32[144,128]{1,0:T(1,128)}', space=vmem, size = 0x12000, scoped, tag = 'internal scratch']
  %s0 = inlined_call_operand.vmem [shape: f32[2,4,256], index: 0, kind: input, shape index: {}]
  %s1 = inlined_call_operand.vmem [shape: f32[8,36], index: 1, kind: input, shape index: {}]
  %s2 = inlined_call_operand.vmem [shape: f32[9,256], index: 2, kind: input, shape index: {}]
  %s3 = inlined_call_operand.vmem [shape: f32[2,8,256], index: 3, kind: output, shape index: {}]
  %s4 = sld [smem:[#allocation0]]
  $region45: #{upsample_forward.1} parent=0
    _
  %s6 = ssub.s32 1, %s4
  %s7 = scalar_select 0, %s6, %s4
  loop: start=0, step=1, limit=4
  $region2: #{upsample_forward.1} parent=0 // loop_pre_header
    _
  $region3: #{upsample_forward.1} parent=0 // loop_header
    %s9 = sphi 0, %s13
    %p10 = scmp.ge.s32.totalorder %s9, 4
    %s19 = sphi 0, %s21
    %s22 = sphi 0, %s19
    %s23 = sphi 0, %s22
    %s39 = sphi 0, %s23
    %s43 = sphi 0, %s43
    %s45 = sphi 0, %s43
    %s46 = sphi 0, %s45
    %s60 = sphi 0, %s46
    %s64 = sphi 0, %s64
    %s66 = sphi 0, %s64
    %s67 = sphi 0, %s66
    %s81 = sphi 0, %s67
    %s87 = sphi 0, %s89
    %s90 = sphi 0, %s87
    %s91 = sphi 0, %s90
    %s107 = sphi 0, %s91
  $region4: #{upsample_forward.1} parent=0 // loop_header_branch
    %12 = sbr.rel (%p10) target = $region8
  $region5: #{upsample_forward.1} parent=0 // loop_body
    %s14 = ssub.s32 %s9, 1
    %s15 = ssub.s32 %s9, 2
    %s16 = sadd.s32 %s9, 1
    %s17 = ssub.s32 %s9, %s16
    %p18 = scmp.eq.s32.totalorder %s17, 0
    %s20 = sadd.s32 %s19, 1
    %s21 = scalar_select %p18, %s19, %s20
    %p24 = pneg %p18
    %p25 = scmp.eq.s32.totalorder %s9, 1
    %p26 = por %p24, %p25
    %p27 = scmp.ne.s32.totalorder %s19, %s22
    %p28 = scmp.eq.s32.totalorder %s9, 0
    %p29 = por %p27, %p28
    %p30 = scmp.ne.s32.totalorder %s19, %s22
    %p31 = scmp.eq.s32.totalorder %s14, 1
    %p32 = por %p30, %p31
    %p33 = scmp.ne.s32.totalorder %s22, %s23
    %p34 = scmp.eq.s32.totalorder %s14, 0
    %p35 = por %p33, %p34
    %p36 = scmp.ne.s32.totalorder %s22, %s23
    %p37 = scmp.eq.s32.totalorder %s15, 1
    %p38 = por %p36, %p37
    %p40 = scmp.ne.s32.totalorder %s23, %s39
    %p41 = scmp.eq.s32.totalorder %s15, 0
    %p42 = por %p40, %p41
    %s44 = sadd.s32 %s43, 1
    %p47 = scmp.eq.s32.totalorder %s9, 1
    %p48 = scmp.ne.s32.totalorder %s43, %s45
    %p49 = scmp.eq.s32.totalorder %s9, 0
    %p50 = por %p48, %p49
    %p51 = scmp.ne.s32.totalorder %s43, %s45
    %p52 = scmp.eq.s32.totalorder %s14, 1
    %p53 = por %p51, %p52
    %p54 = scmp.ne.s32.totalorder %s45, %s46
    %p55 = scmp.eq.s32.totalorder %s14, 0
    %p56 = por %p54, %p55
    %p57 = scmp.ne.s32.totalorder %s45, %s46
    %p58 = scmp.eq.s32.totalorder %s15, 1
    %p59 = por %p57, %p58
    %p61 = scmp.ne.s32.totalorder %s46, %s60
    %p62 = scmp.eq.s32.totalorder %s15, 0
    %p63 = por %p61, %p62
    %s65 = sadd.s32 %s64, 1
    %p68 = scmp.eq.s32.totalorder %s9, 1
    %p69 = scmp.ne.s32.totalorder %s64, %s66
    %p70 = scmp.eq.s32.totalorder %s9, 0
    %p71 = por %p69, %p70
    %p72 = scmp.ne.s32.totalorder %s64, %s66
    %p73 = scmp.eq.s32.totalorder %s14, 1
    %p74 = por %p72, %p73
    %p75 = scmp.ne.s32.totalorder %s66, %s67
    %p76 = scmp.eq.s32.totalorder %s14, 0
    %p77 = por %p75, %p76
    %p78 = scmp.ne.s32.totalorder %s66, %s67
    %p79 = scmp.eq.s32.totalorder %s15, 1
    %p80 = por %p78, %p79
    %p82 = scmp.ne.s32.totalorder %s67, %s81
    %p83 = scmp.eq.s32.totalorder %s15, 0
    %p84 = por %p82, %p83
    %s85 = ssub.s32 %s9, %s16
    %p86 = scmp.eq.s32.totalorder %s85, 0
    %s88 = sadd.s32 %s87, 1
    %s89 = scalar_select %p86, %s87, %s88
    %p92 = pneg %p86
    %p93 = scmp.eq.s32.totalorder %s9, 1
    %p94 = por %p92, %p93
    %p95 = scmp.ne.s32.totalorder %s87, %s90
    %p96 = scmp.eq.s32.totalorder %s9, 0
    %p97 = por %p95, %p96
    %p98 = scmp.ne.s32.totalorder %s87, %s90
    %p99 = scmp.eq.s32.totalorder %s14, 1
    %p100 = por %p98, %p99
    %p101 = scmp.ne.s32.totalorder %s90, %s91
    %p102 = scmp.eq.s32.totalorder %s14, 0
    %p103 = por %p101, %p102
    %p104 = scmp.ne.s32.totalorder %s90, %s91
    %p105 = scmp.eq.s32.totalorder %s15, 1
    %p106 = por %p104, %p105
    %p108 = scmp.ne.s32.totalorder %s91, %s107
    %p109 = scmp.eq.s32.totalorder %s15, 0
    %p110 = por %p108, %p109
    %p111 = scmp.le.s32.totalorder 1, %s9
    %p112 = scmp.lt.s32.totalorder %s9, 3
    %p113 = pnand %p111, %p112
    %p114 = pneg %p113
    // Predicated region
    $region9: #{upsample_forward.1} parent=5 // pred_check
      _
    $region10: #{upsample_forward.1} parent=5 // pred_check_branch
      %116 = sbr.rel (%p113) target = $region12
    $region11: #{upsample_forward.1} parent=5 // pred_region
      %s117 = ssub.s32 %s9, 1
      // Predicated region
      $region13: #{upsample_forward.1} parent=11 // pred_check
        %p118 = pneg %p56
      $region14: #{upsample_forward.1} parent=11 // pred_check_branch
        %120 = sbr.rel (%p118) target = $region16
      $region15: #{upsample_forward.1} parent=11 // pred_region
        _
      $region16: #{upsample_forward.1} parent=11 // pred_fallthru
        _
      // Predicated region
      $region17: #{upsample_forward.1} parent=11 // pred_check
        %p121 = pneg %p77
      $region18: #{upsample_forward.1} parent=11 // pred_check_branch
        %123 = sbr.rel (%p121) target = $region20
      $region19: #{upsample_forward.1} parent=11 // pred_region
        _
      $region20: #{upsample_forward.1} parent=11 // pred_fallthru
        _
    $region12: #{upsample_forward.1} parent=5 // pred_fallthru
      _
    %p124 = scmp.lt.s32.totalorder %s9, 2
    // Predicated region
    $region21: #{upsample_forward.1} parent=5 // pred_check
      %p125 = pneg %p124
    $region22: #{upsample_forward.1} parent=5 // pred_check_branch
      %127 = sbr.rel (%p125) target = $region24
    $region23: #{upsample_forward.1} parent=5 // pred_region
      // Predicated region
      $region25: #{upsample_forward.1} parent=23 // pred_check
        %p128 = pneg %p29
      $region26: #{upsample_forward.1} parent=23 // pred_check_branch
        %130 = sbr.rel (%p128) target = $region28
      $region27: #{upsample_forward.1} parent=23 // pred_region
        %p131 = scmp.lt.s32.totalorder %s9, 1
        %s132 = scalar_select %p131, %s9, 1
        %s133 = smul.addr %s132, 2
        %s134 = smul.addr %s133, 4
        %s135 = scalar_lea.vmem %s0, %s134
      $region28: #{upsample_forward.1} parent=23 // pred_fallthru
        _
    $region24: #{upsample_forward.1} parent=5 // pred_fallthru
      _
    %p136 = scmp.le.s32.totalorder 1, %s9
    %p137 = scmp.lt.s32.totalorder %s9, 3
    %p138 = pnand %p136, %p137
    %p139 = pneg %p138
    // Predicated region
    $region29: #{upsample_forward.1} parent=5 // pred_check
      _
    $region30: #{upsample_forward.1} parent=5 // pred_check_branch
      %141 = sbr.rel (%p138) target = $region32
    $region31: #{upsample_forward.1} parent=5 // pred_region
      %s142 = ssub.s32 %s9, 1
      %p143 = scmp.lt.s32.totalorder %s14, 1
      %s144 = scalar_select %p143, %s14, 1
      %s145 = smul.addr %s144, 2
      %s146 = smul.addr %s145, 4
      %s147 = scalar_lea.vmem %s0, %s146
      %p148 = pneg %p35
      %p149 = pneg %p32
      %p150 = pneg %p56
      %p151 = pneg %p53
      %p152 = pneg %p77
      %p153 = pneg %p74
      %p154 = pneg %p103
      %p155 = pneg %p100
      %p156 = scmp.lt.s32.totalorder %s14, 1
      %s157 = scalar_select %p156, %s14, 1
      %s158 = smul.addr %s157, 2
      %s159 = smul.addr %s158, 8
      %s160 = scalar_lea.vmem %s3, %s159
      %p161 = scmp.lt.s32.totalorder %s14, 1
      %s162 = scalar_select %p161, %s14, 1
      %s163 = smul.addr %s162, 2
      %s164 = smul.addr %s163, 4
      %s165 = scalar_lea.vmem %s0, %s164
      %p166 = scmp.lt.s32.totalorder %s14, 1
      %s167 = scalar_select %p166, %s14, 1
      %s168 = smul.addr %s167, 2
      %s169 = smul.addr %s168, 8
      %s170 = scalar_lea.vmem %s3, %s169
      %v171 = vld [vmem:[%s165] sm:$0xff]
      %v172 = vld [vmem:[%s2] sm:$0xff]
      %v173 = vld [vmem:[%s2 + $0x8] sm:$0xff]
      %v174 = vld [vmem:[%s2 + $0x10] sm:$0x1]
      %v175 = vld [vmem:[%s2 + $0x18] sm:$0x1]
      %v177 = vcombine.high %v171, %v171
      %178 = vrot.lane.b32.xlu0 %v177, 17
      %v179 = vpop.permute.xlu0 %178
      %181 = vrot.lane.b32.xlu0 %v171, 17
      %v182 = vpop.permute.xlu0 %181
      %vm183 = vcmask 138240
      %v184 = vsel %vm183, %v182, %v179
      %v187 = vsel %vm183, %v179, %v182
      %v188 = vlaneseq
      %v189 = vshrl.u32 %v188, 7
      %v190 = vsub.s32 0, %v189
      %v191 = vrot.slane %v172, %v190
      %v192 = vlaneseq
      %v193 = vshrl.u32 %v192, 7
      %v194 = vsub.s32 0, %v193
      %v195 = vrot.slane %v173, %v194
      %v196 = vmul.f32 %v187, %v191
      %v197 = vmul.f32 %v184, %v195
      %198 = vrot.lane.b32.xlu0 %v177, 16
      %v199 = vpop.permute.xlu0 %198
      %201 = vrot.lane.b32.xlu0 %v171, 16
      %v202 = vpop.permute.xlu0 %201
      %vm203 = vcmask 130048
      %v204 = vsel %vm203, %v202, %v199
      %v207 = vsel %vm203, %v199, %v202
      %v208 = vlaneseq
      %v209 = vshrl.u32 %v208, 7
      %v210 = vsub.s32 1, %v209
      %v211 = vrot.slane %v172, %v210
      %v212 = vlaneseq
      %v213 = vshrl.u32 %v212, 7
      %v214 = vsub.s32 1, %v213
      %v215 = vrot.slane %v173, %v214
      %v216 = vmul.f32 %v207, %v211
      %v217 = vmul.f32 %v204, %v215
      %218 = vrot.lane.b32.xlu0 %v177, 15
      %v219 = vpop.permute.xlu0 %218
      %221 = vrot.lane.b32.xlu0 %v171, 15
      %v222 = vpop.permute.xlu0 %221
      %vm223 = vcmask 121856
      %v224 = vsel %vm223, %v222, %v219
      %v227 = vsel %vm223, %v219, %v222
      %v228 = vlaneseq
      %v229 = vshrl.u32 %v228, 7
      %v230 = vsub.s32 2, %v229
      %v231 = vrot.slane %v172, %v230
      %v232 = vlaneseq
      %v233 = vshrl.u32 %v232, 7
      %v234 = vsub.s32 2, %v233
      %v235 = vrot.slane %v173, %v234
      %v236 = vmul.f32 %v227, %v231
      %v237 = vmul.f32 %v224, %v235
      %238 = vrot.lane.b32.xlu0 %v177, 1
      %v239 = vpop.permute.xlu0 %238
      %241 = vrot.lane.b32.xlu0 %v171, 1
      %v242 = vpop.permute.xlu0 %241
      %vm243 = vcmask 7168
      %v244 = vsel %vm243, %v242, %v239
      %v247 = vsel %vm243, %v239, %v242
      %v248 = vlaneseq
      %v249 = vshrl.u32 %v248, 7
      %v250 = vsub.s32 3, %v249
      %v251 = vrot.slane %v172, %v250
      %v252 = vlaneseq
      %v253 = vshrl.u32 %v252, 7
      %v254 = vsub.s32 3, %v253
      %v255 = vrot.slane %v173, %v254
      %v256 = vmul.f32 %v247, %v251
      %v257 = vmul.f32 %v244, %v255
      %v258 = vlaneseq
      %v259 = vshrl.u32 %v258, 7
      %v260 = vsub.s32 4, %v259
      %v261 = vrot.slane %v172, %v260
      %v262 = vlaneseq
      %v263 = vshrl.u32 %v262, 7
      %v264 = vsub.s32 4, %v263
      %v265 = vrot.slane %v173, %v264
      %v268 = vcombine.low %v261, %v265
      %v270 = vmul.f32 %v171, %v268
      %271 = vrot.lane.b32.xlu0 %v171, 127
      %v272 = vpop.permute.xlu0 %271
      %273 = vrot.lane.b32.xlu0 %v177, 127
      %v274 = vpop.permute.xlu0 %273
      %vm275 = vcmask 1039360
      %v276 = vsel %vm275, %v272, %v274
      %v280 = vsel %vm275, %v274, %v272
      %v281 = vlaneseq
      %v282 = vshrl.u32 %v281, 7
      %v283 = vsub.s32 5, %v282
      %v284 = vrot.slane %v172, %v283
      %v285 = vlaneseq
      %v286 = vshrl.u32 %v285, 7
      %v287 = vsub.s32 5, %v286
      %v288 = vrot.slane %v173, %v287
      %v289 = vmul.f32 %v276, %v284
      %v290 = vmul.f32 %v280, %v288
      %291 = vrot.lane.b32.xlu0 %v171, 113
      %v292 = vpop.permute.xlu0 %291
      %293 = vrot.lane.b32.xlu0 %v177, 113
      %v294 = vpop.permute.xlu0 %293
      %vm295 = vcmask 924672
      %v296 = vsel %vm295, %v292, %v294
      %v300 = vsel %vm295, %v294, %v292
      %v301 = vlaneseq
      %v302 = vshrl.u32 %v301, 7
      %v303 = vsub.s32 6, %v302
      %v304 = vrot.slane %v172, %v303
      %v305 = vlaneseq
      %v306 = vshrl.u32 %v305, 7
      %v307 = vsub.s32 6, %v306
      %v308 = vrot.slane %v173, %v307
      %v309 = vmul.f32 %v296, %v304
      %v310 = vmul.f32 %v300, %v308
      %311 = vrot.lane.b32.xlu0 %v171, 112
      %v312 = vpop.permute.xlu0 %311
      %313 = vrot.lane.b32.xlu0 %v177, 112
      %v314 = vpop.permute.xlu0 %313
      %vm315 = vcmask 916480
      %v316 = vsel %vm315, %v312, %v314
      %v320 = vsel %vm315, %v314, %v312
      %v321 = vlaneseq
      %v322 = vshrl.u32 %v321, 7
      %v323 = vsub.s32 7, %v322
      %v324 = vrot.slane %v172, %v323
      %v325 = vlaneseq
      %v326 = vshrl.u32 %v325, 7
      %v327 = vsub.s32 7, %v326
      %v328 = vrot.slane %v173, %v327
      %v329 = vmul.f32 %v316, %v324
      %v330 = vmul.f32 %v320, %v328
      %331 = vrot.lane.b32.xlu0 %v171, 111
      %v332 = vpop.permute.xlu0 %331
      %333 = vrot.lane.b32.xlu0 %v177, 111
      %v334 = vpop.permute.xlu0 %333
      %vm335 = vcmask 908288
      %v336 = vsel %vm335, %v332, %v334
      %v340 = vsel %vm335, %v334, %v332
      %v341 = vlaneseq
      %v342 = vshrl.u32 %v341, 7
      %v343 = vsub.s32 0, %v342
      %v344 = vrot.slane %v174, %v343
      %v345 = vlaneseq
      %v346 = vshrl.u32 %v345, 7
      %v347 = vsub.s32 0, %v346
      %v348 = vrot.slane %v175, %v347
      %v349 = vmul.f32 %v336, %v344
      %v350 = vmul.f32 %v340, %v348
      %v353 = vrot.slane %v216, 4
      %v354 = vrot.slane %v217, 4
      %v359 = vrot.slane %v256, 4
      %v360 = vrot.slane %v257, 4
      %v364 = vcombine.high %v270, %v270
      %v368 = vrot.slane %v289, 4
      %v369 = vrot.slane %v290, 4
      %v374 = vrot.slane %v329, 4
      %v375 = vrot.slane %v330, 4
      %vm378 = vcmask 1043456
      %v379 = vsel %vm378, %v196, %v353
      %v380 = vsel %vm378, %v197, %v354
      %v381 = vsel %vm378, %v236, %v359
      %v382 = vsel %vm378, %v237, %v360
      %v383 = vsel %vm378, %v270, %v368
      %v384 = vsel %vm378, %v364, %v369
      %v385 = vsel %vm378, %v309, %v374
      %v386 = vsel %vm378, %v310, %v375
      %v387 = vld [vmem:[%s1] sm:$0xff]
      %vm388 = vcmask 293888
      %v390 = vsel %vm388, %v387, 0
      %v393 = vsel %vm378, %v349, 0
      %v396 = vsel %vm378, %v350, 0
      %398 = vmatprep.subr.mxu0 %v380
      %399 = vmatpush1.msra.mxu0 %v379
      %400 = vmatprep.subr.mxu0 %v382
      %401 = vmatpush1.msra.mxu0 %v381
      %402 = vmatprep.subr.mxu0 %v384
      %403 = vmatpush1.msra.mxu0 %v383
      %404 = vmatprep.subr.mxu0 %v386
      %405 = vmatpush1.msra.mxu0 %v385
      %406 = vmatprep.subr.mxu0 %v396
      %407 = vmatpush1.msra.mxu0 %v393
      %408 = vmatprep.subr.mxu0 0.0
      %409 = vmatpush1.msra.mxu0 0.0
      %410 = vmatprep.subr.mxu0 0.0
      %411 = vmatpush1.msra.mxu0 0.0
      %412 = vmatprep.subr.mxu0 0.0
      %413 = vmatpush1.msra.mxu0 0.0
      %414 = vmatprep.subr.mxu0 0.0
      %415 = vmatpush1.msra.mxu0 0.0
      %416 = vmatprep.subr.mxu0 0.0
      %417 = vmatpush1.msra.mxu0 0.0
      %418 = vmatprep.subr.mxu0 0.0
      %419 = vmatpush1.msra.mxu0 0.0
      %420 = vmatprep.subr.mxu0 0.0
      %421 = vmatpush1.msra.mxu0 0.0
      %422 = vmatprep.subr.mxu0 0.0
      %423 = vmatpush1.msra.mxu0 0.0
      %424 = vmatprep.subr.mxu0 0.0
      %425 = vmatpush1.msra.mxu0 0.0
      %426 = vmatprep.subr.mxu0 0.0
      %427 = vmatpush1.msra.mxu0 0.0
      %428 = vmatprep.subr.mxu0 0.0
      %429 = vmatpush1.msra.mxu0 0.0
      %430 = vmatprep.subr.mxu0 0.0
      %431 = vmatpush1.msra.mxu0 0.0
      %432 = vmatprep.subr.mxu0 0.0
      %433 = vmatpush1.msra.mxu0 0.0
      %434 = vmatprep.subr.mxu0 0.0
      %435 = vmatpush1.msra.mxu0 0.0
      %436 = vmatprep.subr.mxu0 0.0
      %437 = vmatpush1.msra.mxu0 0.0
      %438 = vmatprep.subr.mxu0 0.0
      %439 = vmatpush1.msra.mxu0 0.0
      %440 = vmatprep.subr.mxu0 0.0
      %441 = vmatpush1.msra.mxu0 0.0
      %442 = vmatprep.subr.mxu0 0.0
      %443 = vmatpush1.msra.mxu0 0.0
      %444 = vmatprep.subr.mxu0 0.0
      %445 = vmatpush1.msra.mxu0 0.0
      %446 = vmatprep.subr.mxu0 0.0
      %447 = vmatpush1.msra.mxu0 0.0
      %448 = vmatprep.subr.mxu0 0.0
      %449 = vmatpush1.msra.mxu0 0.0
      %450 = vmatprep.subr.mxu0 0.0
      %451 = vmatpush1.msra.mxu0 0.0
      %452 = vmatprep.subr.mxu0 0.0
      %453 = vmatpush1.msra.mxu0 0.0
      %454 = vmatprep.subr.mxu0 0.0
      %455 = vmatpush1.msra.mxu0 0.0
      %456 = vmatprep.subr.mxu0 0.0
      %457 = vmatpush1.msra.mxu0 0.0
      %458 = vmatprep.subr.mxu0 0.0
      %459 = vmatpush1.msra.mxu0 0.0
      %460 = vmatprep.subr.mxu0 0.0
      %461 = vmatpush1.msra.mxu0 0.0
      %462 = vmatprep.mubr.f32.mxu0 0.0
      %463 = vmatmul.mubr.f32.gmra.mrb[0].mxu0 %v390
      %v464 = vpop.f32.mrb[0].mxu0
      %v465 = vadd.f32 0.0, %v464
      %v466 = vpop.f32.mrb[0].mxu0
      %v467 = vadd.f32 0.0, %v466
      %468 = vdwg.mxu0
      %469 = vst [vmem:[%s170] sm:$0xff] %v465
      %470 = vst [vmem:[%s170 + $0x8] sm:$0xff] %v467
      %p471 = scmp.lt.s32.totalorder %s14, 1
      %s472 = scalar_select %p471, %s14, 1
      %s473 = smul.addr %s472, 2
      %s474 = smul.addr %s473, 8
      %s475 = scalar_lea.vmem %s3, %s474
      // Predicated region
      $region33: #{upsample_forward.1} parent=31 // pred_check
        %p476 = pneg %p100
      $region34: #{upsample_forward.1} parent=31 // pred_check_branch
        %478 = sbr.rel (%p476) target = $region36
      $region35: #{upsample_forward.1} parent=31 // pred_region
        _
      $region36: #{upsample_forward.1} parent=31 // pred_fallthru
        _
    $region32: #{upsample_forward.1} parent=5 // pred_fallthru
      _
    %p479 = scmp.le.s32.totalorder 2, %s9
    // Predicated region
    $region37: #{upsample_forward.1} parent=5 // pred_check
      %p480 = pneg %p479
    $region38: #{upsample_forward.1} parent=5 // pred_check_branch
      %482 = sbr.rel (%p480) target = $region40
    $region39: #{upsample_forward.1} parent=5 // pred_region
      %s483 = ssub.s32 %s9, 2
      // Predicated region
      $region41: #{upsample_forward.1} parent=39 // pred_check
        %p484 = pneg %p106
      $region42: #{upsample_forward.1} parent=39 // pred_check_branch
        %486 = sbr.rel (%p484) target = $region44
      $region43: #{upsample_forward.1} parent=39 // pred_region
        %p487 = scmp.lt.s32.totalorder %s15, 1
        %s488 = scalar_select %p487, %s15, 1
        %s489 = smul.addr %s488, 2
        %s490 = smul.addr %s489, 8
        %s491 = scalar_lea.vmem %s3, %s490
      $region44: #{upsample_forward.1} parent=39 // pred_fallthru
        _
    $region40: #{upsample_forward.1} parent=5 // pred_fallthru
      _
  $region6: #{upsample_forward.1} parent=0 // loop_footer
    %s13 = sadd.s32 1, %s9
  $region7: #{upsample_forward.1} parent=0 // loop_footer_branch
    %8 = sbr.rel target = $region3
  $region8: #{upsample_forward.1} parent=0 // loop_exit
    _

</llo_original>
